<compile_context>
chip_gen: v6e
topology: v6e:2x2x1
jax: 0.10.0
libtpu: 0.0.40
codegen_flags: <defaults>
</compile_context>

<pallas_src>
import functools

import jax
import jax.numpy as jnp
from jax.experimental import pallas as pl
from jax.experimental.pallas import tpu as pltpu

GAMMA = 2.0
ALPHA = 0.25

_OUT_LANES = 128            # lane-dense partial-sum output width
_TGT_ROW_BYTES = 128 * 4    # a (TN, 1) int32 tile pads to 128 lanes in VMEM


def _vmem_budgets():
    """Generation-aware (vmem_limit_bytes, per-logits-block byte budget)."""
    try:
        cap = int(pltpu.get_tpu_info().vmem_capacity_bytes)
    except Exception:
        cap = 64 * 1024 * 1024          # conservative default (v7x per-TC VMEM)
    # ~48 MiB on v7x (64 MiB physical), ~96 MiB on v5e/v6e (128 MiB physical).
    vmem_limit = min((cap * 3) // 4, 96 * 1024 * 1024)
    # Double-buffered input + targets tile + f32 LSE intermediates headroom.
    block_budget = vmem_limit // 8
    return vmem_limit, block_budget


def _sublane_packing(itemsize):
    return max(8, 32 // itemsize)       # 8 for f32, 16 for bf16, 32 for int8


def _choose_block_rows(n, c, itemsize, block_budget):
    packing = _sublane_packing(itemsize)
    bytes_per_row = c * itemsize + _TGT_ROW_BYTES   # logits row + padded targets row
    rows = (block_budget // bytes_per_row) // packing * packing
    rows = max(rows, packing)
    if n >= 2 * packing:
        # Keep >= 2 grid steps so both v7x TensorCores split the sweep
        # (costs one extra ~0.35us grid step on v5e/v6e -> negligible).
        half = -(-((n + 1) // 2) // packing) * packing
        rows = min(rows, half)
    if rows >= n:
        return n                        # single full-extent block (always legal)
    return rows


def _focal_ce_chunk_kernel(logits_ref, targets_ref, partial_ref, *, n_total):
    """Per grid step: summed cross-entropy of one (TN, C) row chunk."""
    i = pl.program_id(0)
    xn = logits_ref[...]                               # (TN, C) native dtype
    t = targets_ref[...]                               # (TN, 1) int32
    tn = xn.shape[0]

    # Rows past the true batch size (ragged last tile) are padding.
    row = jax.lax.broadcasted_iota(jnp.int32, (tn, 1), 0) + i * tn
    valid = row < n_total                              # (TN, 1) bool

    # Numerically stable log-sum-exp over classes (lane axis), f32 math.
    x = xn.astype(jnp.float32)
    m = jnp.max(x, axis=-1, keepdims=True)                               # (TN, 1)
    lse = jnp.log(jnp.sum(jnp.exp(x - m), axis=-1, keepdims=True)) + m   # (TN, 1)
    # TODO(synk): if v7x profiling shows the single EUP saturating, compute the
    # exp in bf16 and accumulate the lane-sum in f32.

    # logits[i, target_i] via a one-hot class mask, selected on the native
    # dtype (packed bf16 VALU on v6e/v7x); only the (TN,1) result is cast.
    cls = jax.lax.broadcasted_iota(jnp.int32, xn.shape, 1)               # (TN, C)
    zero = jnp.zeros((), xn.dtype)
    tgt_logit = jnp.sum(jnp.where(cls == t, xn, zero),
                        axis=-1, keepdims=True).astype(jnp.float32)      # (TN, 1)
    # TODO(synk): out-of-range targets silently yield tgt_logit=0 instead of
    # raising like torch CrossEntropyLoss.

    # Row-level select zeroes padded rows; NaN/Inf in pad garbage cannot leak.
    per_sample = jnp.where(valid, lse - tgt_logit, 0.0)                  # (TN, 1)
    chunk_ce = jnp.sum(per_sample, axis=0, keepdims=True)                # (1, 1)

    # Lane-dense output block: unmasked full-width store every grid step.
    partial_ref[...] = jnp.broadcast_to(chunk_ce, (1, _OUT_LANES))


def focal_loss(logits, targets, *, gamma=GAMMA, alpha=ALPHA, block_rows=None):
    """logits: (N, C) f32/bf16; targets: (N,) int class indices -> scalar f32."""
    n, c = logits.shape
    targets2d = targets.reshape(n, 1).astype(jnp.int32)

    itemsize = jnp.dtype(logits.dtype).itemsize
    packing = _sublane_packing(itemsize)
    vmem_limit, block_budget = _vmem_budgets()

    if block_rows is None:
        block_rows = _choose_block_rows(n, c, itemsize, block_budget)
    else:
        block_rows = int(min(block_rows, n))
        if block_rows < n:
            block_rows = max(packing, (block_rows // packing) * packing)

    num_chunks = int(pl.cdiv(n, block_rows))

    partial = pl.pallas_call(
        functools.partial(_focal_ce_chunk_kernel, n_total=n),
        out_shape=jax.ShapeDtypeStruct((num_chunks, _OUT_LANES), jnp.float32),
        grid=(num_chunks,),
        in_specs=[
            pl.BlockSpec((block_rows, c), lambda i: (i, 0)),   # native dtype: no host upcast
            pl.BlockSpec((block_rows, 1), lambda i: (i, 0)),
        ],
        out_specs=pl.BlockSpec((1, _OUT_LANES), lambda i: (i, 0)),
        compiler_params=pltpu.CompilerParams(
            dimension_semantics=("parallel",),      # v7x: both TCs split the sweep
            vmem_limit_bytes=int(vmem_limit),
        ),
    )(logits, targets2d)

    # Scalar epilogue: global mean CE + focal transform (matches the module,
    # which applies the focal factor to the *mean* CE).
    ce = jnp.sum(partial[:, 0]) / jnp.float32(n)
    pt = jnp.exp(-ce)
    return jnp.float32(alpha) * (1.0 - pt) ** jnp.float32(gamma) * ce


def _focal_reference(logits, targets, gamma=GAMMA, alpha=ALPHA):
    logits = logits.astype(jnp.float32)
    logp = jax.nn.log_softmax(logits, axis=-1)
    ce = -jnp.mean(logp[jnp.arange(logits.shape[0]), targets])
    pt = jnp.exp(-ce)
    return alpha * (1.0 - pt) ** gamma * ce


if __name__ == "__main__":
    key = jax.random.PRNGKey(0)
    k1, k2, k3, k4 = jax.random.split(key, 4)

    # Case 1: small f32 case (single full-extent block), like the module's toy usage.
    N, C = 8, 32
    logits = jax.random.normal(k1, (N, C), dtype=jnp.float32)
    targets = jax.random.randint(k2, (N,), 0, C, dtype=jnp.int32)
    loss = focal_loss(logits, targets)
    jax.block_until_ready(loss)
    ref = _focal_reference(logits, targets)
    assert jnp.allclose(loss, ref, rtol=1e-5, atol=1e-6), (loss, ref)

    # Case 2: bf16 inputs, auto block sizing -> 2 chunks (v7x split) with a
    # ragged last tile (50 rows, 32-row blocks -> last tile has 18 valid rows).
    N2, C2 = 50, 128
    logits2 = jax.random.normal(k3, (N2, C2), dtype=jnp.float32).astype(jnp.bfloat16)
    targets2 = jax.random.randint(k4, (N2,), 0, C2, dtype=jnp.int32)
    loss2 = focal_loss(logits2, targets2)
    jax.block_until_ready(loss2)
    ref2 = _focal_reference(logits2.astype(jnp.float32), targets2)
    assert jnp.allclose(loss2, ref2, rtol=1e-4, atol=1e-5), (loss2, ref2)

    # Case 3: explicit small blocks -> 4-step grid, ragged last tile (2 valid rows).
    loss3 = focal_loss(logits2, targets2, block_rows=16)
    jax.block_until_ready(loss3)
    assert jnp.allclose(loss3, ref2, rtol=1e-4, atol=1e-5), (loss3, ref2)

    print("KERNEL_OK")
</pallas_src>

<mosaic_0001>
module attributes {stable_mosaic.version = 11 : i64} {
  func.func @_focal_ce_chunk_kernel(%arg0: i32, %arg1: memref<8x32xf32, #tpu.memory_space<vmem>>, %arg2: memref<8x1xi32, #tpu.memory_space<vmem>>, %arg3: memref<1x128xf32, #tpu.memory_space<vmem>>) attributes {dimension_semantics = [#tpu.dimension_semantics<parallel>], iteration_bounds = array<i64: 1>, scalar_prefetch = 0 : i64, scratch_operands = 0 : i64, tpu.core_type = #tpu.core_type<tc>, window_params = [{transform_indices = @transform_0, window_bounds = array<i64: 8, 32>}, {transform_indices = @transform_1, window_bounds = array<i64: 8, 1>}, {transform_indices = @transform_2, window_bounds = array<i64: 1, 128>}]} {
    %c0 = arith.constant 0 : index
    %c0_0 = arith.constant 0 : index
    %0 = vector.load %arg1[%c0, %c0_0] : memref<8x32xf32, #tpu.memory_space<vmem>>, vector<8x32xf32>
    %c0_1 = arith.constant 0 : index
    %c0_2 = arith.constant 0 : index
    %1 = vector.load %arg2[%c0_1, %c0_2] : memref<8x1xi32, #tpu.memory_space<vmem>>, vector<8x1xi32>
    %2 = tpu.iota {dimensions = array<i32: 0>} : vector<8x1xi32>
    %c8_i32 = arith.constant 8 : i32
    %3 = arith.muli %arg0, %c8_i32 : i32
    %4 = vector.broadcast %3 : i32 to vector<8x1xi32>
    %5 = arith.addi %2, %4 : vector<8x1xi32>
    %c8_i32_3 = arith.constant 8 : i32
    %6 = vector.broadcast %c8_i32_3 : i32 to vector<8x1xi32>
    %7 = arith.cmpi slt, %5, %6 : vector<8x1xi32>
    %cst = arith.constant dense<0xFF800000> : vector<8xf32>
    %8 = vector.multi_reduction <maximumf>, %0, %cst [1] : vector<8x32xf32> to vector<8xf32>
    %9 = vector.shape_cast %8 : vector<8xf32> to vector<8x1xf32>
    %10 = vector.broadcast %9 : vector<8x1xf32> to vector<8x32xf32>
    %11 = arith.subf %0, %10 : vector<8x32xf32>
    %12 = math.exp %11 : vector<8x32xf32>
    %cst_4 = arith.constant dense<0.000000e+00> : vector<8xf32>
    %13 = vector.multi_reduction <add>, %12, %cst_4 [1] : vector<8x32xf32> to vector<8xf32>
    %14 = vector.shape_cast %13 : vector<8xf32> to vector<8x1xf32>
    %15 = math.log %14 : vector<8x1xf32>
    %16 = arith.addf %15, %9 : vector<8x1xf32>
    %17 = tpu.iota {dimensions = array<i32: 1>} : vector<8x32xi32>
    %18 = vector.broadcast %1 : vector<8x1xi32> to vector<8x32xi32>
    %19 = arith.cmpi eq, %17, %18 : vector<8x32xi32>
    %cst_5 = arith.constant 0.000000e+00 : f32
    %20 = vector.broadcast %cst_5 : f32 to vector<8x32xf32>
    %21 = arith.select %19, %0, %20 : vector<8x32xi1>, vector<8x32xf32>
    %cst_6 = arith.constant dense<0.000000e+00> : vector<8xf32>
    %22 = vector.multi_reduction <add>, %21, %cst_6 [1] : vector<8x32xf32> to vector<8xf32>
    %23 = vector.shape_cast %22 : vector<8xf32> to vector<8x1xf32>
    %24 = arith.subf %16, %23 : vector<8x1xf32>
    %cst_7 = arith.constant 0.000000e+00 : f32
    %25 = vector.broadcast %cst_7 : f32 to vector<8x1xf32>
    %26 = arith.select %7, %24, %25 : vector<8x1xi1>, vector<8x1xf32>
    %cst_8 = arith.constant dense<0.000000e+00> : vector<1xf32>
    %27 = vector.multi_reduction <add>, %26, %cst_8 [0] : vector<8x1xf32> to vector<1xf32>
    %28 = vector.shape_cast %27 : vector<1xf32> to vector<1x1xf32>
    %29 = vector.shape_cast %28 : vector<1x1xf32> to vector<1x1xf32>
    %30 = vector.broadcast %29 : vector<1x1xf32> to vector<1x128xf32>
    %c0_9 = arith.constant 0 : index
    %c0_10 = arith.constant 0 : index
    %31 = vector.load %arg3[%c0_9, %c0_10] : memref<1x128xf32, #tpu.memory_space<vmem>>, vector<1x128xf32>
    tpu.vector_store %arg3[%c0_9, %c0_10], %30 {strides = array<i32>} : memref<1x128xf32, #tpu.memory_space<vmem>>, vector<1x128xf32>,
    return
  }
  func.func @transform_0(%arg0: i32) -> (i32, i32) {
    %c0_i32 = arith.constant 0 : i32
    %c0_i32_0 = arith.constant 0 : i32
    return %arg0, %c0_i32 : i32, i32
  }
  func.func @transform_1(%arg0: i32) -> (i32, i32) {
    %c0_i32 = arith.constant 0 : i32
    %c0_i32_0 = arith.constant 0 : i32
    return %arg0, %c0_i32 : i32, i32
  }
  func.func @transform_2(%arg0: i32) -> (i32, i32) {
    %c0_i32 = arith.constant 0 : i32
    %c0_i32_0 = arith.constant 0 : i32
    return %arg0, %c0_i32 : i32, i32
  }
}

</mosaic_0001>

<llo_original>
// kernel: tpu_custom_call.1
$region0: #{tpu_custom_call.1}
  #allocation0 [shape = 'u32[]', space=smem, size = 0x4, offset = 0x4, fixed_abs, tag = 'smem constant byte address 0x4 - core index']
  #allocation1 [shape = 'u32[144,128]{1,0:T(1,128)}', space=vmem, size = 0x12000, scoped, tag = 'internal scratch']
  %s0 = inlined_call_operand.vmem [shape: f32[8,32], index: 0, kind: input, shape index: {}]
  %s1 = inlined_call_operand.vmem [shape: s32[8,1], index: 1, kind: input, shape index: {}]
  %s2 = inlined_call_operand.hbm [shape: f32[1,128], index: 2, kind: output, shape index: {}]
  %s3 = sld [smem:[#allocation0]]
  $region18: #{tpu_custom_call.1} parent=0
    _
  %s5 = ssub.s32 1, %s3
  %s6 = scalar_select 0, %s5, %s3
  $region1: #{tpu_custom_call.1} parent=0
    #allocation2 [shape = 'u8[512]{0}', space=vmem, size = 0x400, scoped, tag = 'output window, operand 0, single buffered']
    #allocation3 [shape = 's32[1]{0}', space=sflag, size = 0x4, scoped, tag = 'scoped memory for tpu_custom_call.1']
    %7 = vsyncpa [#allocation3], 0
    // Predicated region
    $region2: #{tpu_custom_call.1} parent=1 // pred_check
      _
    $region3: #{tpu_custom_call.1} parent=1 // pred_check_branch
      %9 = sbr.rel (0) target = $region5
    $region4: #{tpu_custom_call.1} parent=1 // pred_region
      _
    $region5: #{tpu_custom_call.1} parent=1 // pred_fallthru
      _
    // Predicated region
    $region6: #{tpu_custom_call.1} parent=1 // pred_check
      _
    $region7: #{tpu_custom_call.1} parent=1 // pred_check_branch
      %11 = sbr.rel (0) target = $region9
    $region8: #{tpu_custom_call.1} parent=1 // pred_region
      _
    $region9: #{tpu_custom_call.1} parent=1 // pred_fallthru
      _
    %v12 = vld [vmem:[%s0] sm:$0xff]
    %v13 = vld [vmem:[%s1] sm:$0xff]
    %v14 = vlaneseq
    %v15 = vshrl.u32 %v14, 7
    %s16 = smul.u32 0, 8
    %v17 = vstv %s16
    %v18 = vadd.s32 %v15, %v17
    %vm19 = vcmp.lt.s32.totalorder %v18, 8
    %vm20 = vcmask 261120
    %v21 = vsel %vm20, %v12, -inf
    %22 = vmax.xlane.f32.xlu0 %v21
    %v23 = vpop.xlane.xlu0 %22
    %v24 = vsub.f32 %v12, %v23
    %v25 = vmul.f32 %v24, 1.442695
    %v26 = vpow.pop %v25
    %v27 = vsel %vm20, %v26, 0.0
    %28 = vadd.xlane.f32.xlu0 %v27
    %v29 = vpop.xlane.xlu0 %28
    %v30 = vlog2.pop %v29
    %v31 = vmul.f32 %v30, 0.6931472
    %v32 = vadd.f32 %v31, %v23
    %v33 = vlaneseq
    %v34 = vand.u32 %v33, 127
    %35 = vset.pattern.permute.xlu0 0
    %36 = vperm.xlu0 %35, %v13
    %v37 = vpop.permute.xlu0 %36
    %vm38 = vcmp.eq.s32.totalorder %v34, %v37
    %v39 = vsel %vm38, %v12, 0.0
    %v40 = vsel %vm20, %v39, 0.0
    %41 = vadd.xlane.f32.xlu0 %v40
    %v42 = vpop.xlane.xlu0 %41
    %v43 = vsub.f32 %v32, %v42
    %v44 = vsel %vm19, %v43, 0.0
    %v45 = vrot.slane %v44, 4
    %v46 = vadd.f32 %v44, %v45
    %v47 = vrot.slane %v46, 2
    %v48 = vadd.f32 %v46, %v47
    %v49 = vrot.slane %v48, 1
    %v50 = vadd.f32 %v48, %v49
    %51 = vst [vmem:[#allocation2] sm:$0x1] %v50
    // Predicated region
    $region10: #{tpu_custom_call.1} parent=1 // pred_check
      _
    $region11: #{tpu_custom_call.1} parent=1 // pred_check_branch
      %53 = sbr.rel (0) target = $region13
    $region12: #{tpu_custom_call.1} parent=1 // pred_region
      %s55 = ssub.s32 16, 16
      %56 = vsyncadd [#allocation3], %s55
      %s58 = sshll.u32 [#allocation2], 4
      %s59 = int_to_ptr.vmem [resolvable:$true] %s58
      %61 = dma.vmem_to_hbm [thread:$0]  %s59, 16, %s2, [#allocation3]
    $region13: #{tpu_custom_call.1} parent=1 // pred_fallthru
      _
    // Predicated region
    $region14: #{tpu_custom_call.1} parent=1 // pred_check
      _
    $region15: #{tpu_custom_call.1} parent=1 // pred_check_branch
      %63 = sbr.rel (0) target = $region17
    $region16: #{tpu_custom_call.1} parent=1 // pred_region
      %64 = dma.done [#allocation3], 16
    $region17: #{tpu_custom_call.1} parent=1 // pred_fallthru
      _
    %65 = vsyncpa [#allocation3], 1

</llo_original>
